<compile_context>
chip_gen: v5e
topology: v5e:2x2
jax: 0.10.0
libtpu: 0.0.40
codegen_flags: <defaults>
</compile_context>

<pallas_src>
import functools

import jax
import jax.numpy as jnp
from jax.experimental import pallas as pl
from jax.experimental.pallas import tpu as pltpu

HIDDEN1 = 16
HIDDEN2 = 32
LANE = 128


def actor_kernel(x_ref, w1_ref, b1_ref, w2_ref, b2_ref, w3_ref, b3_ref, o_ref):
    x = x_ref[...]
    # linear1 + relu
    h1 = jnp.dot(x, w1_ref[...], preferred_element_type=jnp.float32) + b1_ref[...]
    h1 = jnp.maximum(h1, 0.0)
    # linear2 + relu
    h2 = jnp.dot(h1, w2_ref[...], preferred_element_type=jnp.float32) + b2_ref[...]
    h2 = jnp.maximum(h2, 0.0)
    # linear3, computed at 128 padded output lanes (padded biases are -1e30 so
    # those lanes underflow to exactly 0 after exp and never win the max).
    logits = jnp.dot(h2, w3_ref[...], preferred_element_type=jnp.float32) + b3_ref[...]
    # numerically stable softmax over the feature axis
    m = jnp.max(logits, axis=-1, keepdims=True)
    e = jnp.exp(logits - m)
    s = jnp.sum(e, axis=-1, keepdims=True)
    out_size = o_ref.shape[-1]
    # Exact divide (not approx reciprocal): kernel is HBM-bound so this is
    # free, and downstream sampling gets exactly-normalized probabilities.
    o_ref[...] = (e[:, :out_size] / s).astype(o_ref.dtype)


def _round_up(n, m):
    return pl.cdiv(n, m) * m


def prepare_params(params):
    """One-time (hoisted) padding of the final layer to 128 output lanes."""
    w3, b3 = params["w3"], params["b3"]
    h2_size, out_size = w3.shape
    padded_out = _round_up(out_size, LANE)
    if padded_out != out_size:
        w3p = jnp.zeros((h2_size, padded_out), w3.dtype).at[:, :out_size].set(w3)
        # -1e30 on padded lanes: exp(logit - m) == 0 there, softmax unchanged.
        b3p = jnp.full((1, padded_out), -1e30, b3.dtype).at[:, :out_size].set(b3)
    else:
        w3p, b3p = w3, b3
    return {
        "w1": params["w1"], "b1": params["b1"],
        "w2": params["w2"], "b2": params["b2"],
        "w3p": w3p, "b3p": b3p,
        "out_size": out_size,  # python int, kept static
    }


@functools.partial(jax.jit, static_argnames=("out_size", "block_batch"))
def _actor_forward_impl(x, w1, b1, w2, b2, w3p, b3p, *, out_size, block_batch):
    B, in_size = x.shape

    # batch tile: multiple of 8 (f32 sublane); pad B up to a whole grid
    TB = _round_up(min(block_batch, B), 8)
    padded_B = _round_up(B, TB)
    xp = x if padded_B == B else jnp.zeros((padded_B, in_size), x.dtype).at[:B].set(x)
    grid = (padded_B // TB,)

    def streamed(feat):
        # per-grid-step batch block
        return pl.BlockSpec((TB, feat), lambda i: (i, 0))

    def resident(shape):
        # whole (tiny) operand, same block every step -> stays VMEM-resident
        return pl.BlockSpec(shape, lambda i: (0, 0))

    out = pl.pallas_call(
        actor_kernel,
        # Unpadded output in HBM: last block dim == full array dim -> legal,
        # and no 128-lane write amplification / wrapper column slice.
        out_shape=jax.ShapeDtypeStruct((padded_B, out_size), jnp.float32),
        grid_spec=pltpu.PrefetchScalarGridSpec(
            num_scalar_prefetch=0,
            grid=grid,
            in_specs=[
                streamed(in_size),
                resident(w1.shape), resident(b1.shape),
                resident(w2.shape), resident(b2.shape),
                resident(w3p.shape), resident(b3p.shape),
            ],
            out_specs=streamed(out_size),
        ),
        compiler_params=pltpu.CompilerParams(
            # Batch axis is fully independent. "parallel" is safe on every
            # generation. TODO(synk): on v7x, switch to pltpu.CORE_PARALLEL
            # (with TB <= padded_B // 2 so the grid has >= 2 steps) to engage
            # both TensorCores.
            dimension_semantics=("parallel",),
        ),
    )(xp, w1, b1, w2, b2, w3p, b3p)

    return out[:B]


def actor_forward(x, prepared, *, block_batch=2048):
    """x: (B, input_size) f32; prepared: output of prepare_params()."""
    return _actor_forward_impl(
        x,
        prepared["w1"], prepared["b1"],
        prepared["w2"], prepared["b2"],
        prepared["w3p"], prepared["b3p"],
        out_size=prepared["out_size"],
        block_batch=block_batch,
    )


def init_params(key, input_size, output_size):
    ks = jax.random.split(key, 6)

    def linear(kw, kb, fan_in, fan_out):
        # mirrors nn.Linear's U(-1/sqrt(fan_in), 1/sqrt(fan_in)) init
        bound = 1.0 / jnp.sqrt(jnp.float32(fan_in))
        w = jax.random.uniform(kw, (fan_in, fan_out), jnp.float32, -bound, bound)
        b = jax.random.uniform(kb, (1, fan_out), jnp.float32, -bound, bound)
        return w, b

    w1, b1 = linear(ks[0], ks[1], input_size, HIDDEN1)
    w2, b2 = linear(ks[2], ks[3], HIDDEN1, HIDDEN2)
    w3, b3 = linear(ks[4], ks[5], HIDDEN2, output_size)
    return {"w1": w1, "b1": b1, "w2": w2, "b2": b2, "w3": w3, "b3": b3}


def actor_reference(x, p):
    h1 = jnp.maximum(x @ p["w1"] + p["b1"], 0.0)
    h2 = jnp.maximum(h1 @ p["w2"] + p["b2"], 0.0)
    logits = h2 @ p["w3"] + p["b3"]
    return jax.nn.softmax(logits, axis=1)


if __name__ == "__main__":
    key = jax.random.PRNGKey(0)
    k_params, k_x, k_xl = jax.random.split(key, 3)

    batch, input_size, output_size = 2, 8, 4
    params = init_params(k_params, input_size, output_size)
    prepared = prepare_params(params)  # weight padding hoisted out of forward
    x = jax.random.normal(k_x, (batch, input_size), jnp.float32)

    # --- small-batch path (single grid step, padded batch) -------------------
    out = jax.block_until_ready(actor_forward(x, prepared))
    ref = actor_reference(x, params)
    assert out.shape == (batch, output_size)
    assert jnp.allclose(out, ref, atol=1e-3, rtol=1e-3)
    # exact divide -> rows sum to 1 to fp32 precision
    assert jnp.allclose(jnp.sum(out, axis=1), jnp.ones((batch,)), atol=1e-4)

    # --- batched path: block_batch=512 forces multiple grid steps + padding --
    BL = 1040  # not a multiple of the 512-row tile -> exercises padding + grid
    xl = jax.random.normal(k_xl, (BL, input_size), jnp.float32)
    out_l = jax.block_until_ready(actor_forward(xl, prepared, block_batch=512))
    ref_l = actor_reference(xl, params)
    assert out_l.shape == (BL, output_size)
    assert jnp.allclose(out_l, ref_l, atol=1e-3, rtol=1e-3)
    assert jnp.allclose(jnp.sum(out_l, axis=1), jnp.ones((BL,)), atol=1e-4)

    # --- default large-tile path (TB = round_up(B, 8), single step) ----------
    out_d = jax.block_until_ready(actor_forward(xl, prepared))
    assert jnp.allclose(out_d, ref_l, atol=1e-3, rtol=1e-3)

    print("KERNEL_OK")
</pallas_src>

<mosaic_0001>
module attributes {stable_mosaic.version = 11 : i64} {
  func.func @actor_kernel(%arg0: i32, %arg1: memref<8x8xf32, #tpu.memory_space<vmem>>, %arg2: memref<8x16xf32, #tpu.memory_space<vmem>>, %arg3: memref<1x16xf32, #tpu.memory_space<vmem>>, %arg4: memref<16x32xf32, #tpu.memory_space<vmem>>, %arg5: memref<1x32xf32, #tpu.memory_space<vmem>>, %arg6: memref<32x128xf32, #tpu.memory_space<vmem>>, %arg7: memref<1x128xf32, #tpu.memory_space<vmem>>, %arg8: memref<8x4xf32, #tpu.memory_space<vmem>>) attributes {dimension_semantics = [#tpu.dimension_semantics<parallel>], iteration_bounds = array<i64: 1>, scalar_prefetch = 0 : i64, scratch_operands = 0 : i64, tpu.core_type = #tpu.core_type<tc>, window_params = [{transform_indices = @transform_0, window_bounds = array<i64: 8, 8>}, {pipeline_mode = #tpu.pipeline_mode<synchronous>, transform_indices = @transform_1, window_bounds = array<i64: 8, 16>}, {pipeline_mode = #tpu.pipeline_mode<synchronous>, transform_indices = @transform_2, window_bounds = array<i64: 1, 16>}, {pipeline_mode = #tpu.pipeline_mode<synchronous>, transform_indices = @transform_3, window_bounds = array<i64: 16, 32>}, {pipeline_mode = #tpu.pipeline_mode<synchronous>, transform_indices = @transform_4, window_bounds = array<i64: 1, 32>}, {pipeline_mode = #tpu.pipeline_mode<synchronous>, transform_indices = @transform_5, window_bounds = array<i64: 32, 128>}, {pipeline_mode = #tpu.pipeline_mode<synchronous>, transform_indices = @transform_6, window_bounds = array<i64: 1, 128>}, {transform_indices = @transform_7, window_bounds = array<i64: 8, 4>}]} {
    %c0 = arith.constant 0 : index
    %c0_0 = arith.constant 0 : index
    %0 = vector.load %arg1[%c0, %c0_0] : memref<8x8xf32, #tpu.memory_space<vmem>>, vector<8x8xf32>
    %c0_1 = arith.constant 0 : index
    %c0_2 = arith.constant 0 : index
    %1 = vector.load %arg2[%c0_1, %c0_2] : memref<8x16xf32, #tpu.memory_space<vmem>>, vector<8x16xf32>
    %cst = arith.constant dense<0.000000e+00> : vector<8x16xf32>
    %2 = tpu.matmul %0, %1, %cst {dimension_numbers = #tpu.dot_dimension_numbers<[1], [0], [0], [1], [0, 0, 1, 1], [], []>} : vector<8x8xf32>, vector<8x16xf32>, vector<8x16xf32> -> vector<8x16xf32>
    %c0_3 = arith.constant 0 : index
    %c0_4 = arith.constant 0 : index
    %3 = vector.load %arg3[%c0_3, %c0_4] : memref<1x16xf32, #tpu.memory_space<vmem>>, vector<1x16xf32>
    %4 = vector.broadcast %3 : vector<1x16xf32> to vector<8x16xf32>
    %5 = arith.addf %2, %4 : vector<8x16xf32>
    %cst_5 = arith.constant 0.000000e+00 : f32
    %6 = vector.broadcast %cst_5 : f32 to vector<8x16xf32>
    %7 = arith.maximumf %5, %6 : vector<8x16xf32>
    %c0_6 = arith.constant 0 : index
    %c0_7 = arith.constant 0 : index
    %8 = vector.load %arg4[%c0_6, %c0_7] : memref<16x32xf32, #tpu.memory_space<vmem>>, vector<16x32xf32>
    %cst_8 = arith.constant dense<0.000000e+00> : vector<8x32xf32>
    %9 = tpu.matmul %7, %8, %cst_8 {dimension_numbers = #tpu.dot_dimension_numbers<[1], [0], [0], [1], [0, 0, 1, 1], [], []>} : vector<8x16xf32>, vector<16x32xf32>, vector<8x32xf32> -> vector<8x32xf32>
    %c0_9 = arith.constant 0 : index
    %c0_10 = arith.constant 0 : index
    %10 = vector.load %arg5[%c0_9, %c0_10] : memref<1x32xf32, #tpu.memory_space<vmem>>, vector<1x32xf32>
    %11 = vector.broadcast %10 : vector<1x32xf32> to vector<8x32xf32>
    %12 = arith.addf %9, %11 : vector<8x32xf32>
    %cst_11 = arith.constant 0.000000e+00 : f32
    %13 = vector.broadcast %cst_11 : f32 to vector<8x32xf32>
    %14 = arith.maximumf %12, %13 : vector<8x32xf32>
    %c0_12 = arith.constant 0 : index
    %c0_13 = arith.constant 0 : index
    %15 = vector.load %arg6[%c0_12, %c0_13] : memref<32x128xf32, #tpu.memory_space<vmem>>, vector<32x128xf32>
    %cst_14 = arith.constant dense<0.000000e+00> : vector<8x128xf32>
    %16 = tpu.matmul %14, %15, %cst_14 {dimension_numbers = #tpu.dot_dimension_numbers<[1], [0], [0], [1], [0, 0, 1, 1], [], []>} : vector<8x32xf32>, vector<32x128xf32>, vector<8x128xf32> -> vector<8x128xf32>
    %c0_15 = arith.constant 0 : index
    %c0_16 = arith.constant 0 : index
    %17 = vector.load %arg7[%c0_15, %c0_16] : memref<1x128xf32, #tpu.memory_space<vmem>>, vector<1x128xf32>
    %18 = vector.broadcast %17 : vector<1x128xf32> to vector<8x128xf32>
    %19 = arith.addf %16, %18 : vector<8x128xf32>
    %cst_17 = arith.constant dense<0xFF800000> : vector<8xf32>
    %20 = vector.multi_reduction <maximumf>, %19, %cst_17 [1] : vector<8x128xf32> to vector<8xf32>
    %21 = vector.shape_cast %20 : vector<8xf32> to vector<8x1xf32>
    %22 = vector.broadcast %21 : vector<8x1xf32> to vector<8x128xf32>
    %23 = arith.subf %19, %22 : vector<8x128xf32>
    %24 = math.exp %23 : vector<8x128xf32>
    %cst_18 = arith.constant dense<0.000000e+00> : vector<8xf32>
    %25 = vector.multi_reduction <add>, %24, %cst_18 [1] : vector<8x128xf32> to vector<8xf32>
    %26 = vector.shape_cast %25 : vector<8xf32> to vector<8x1xf32>
    %27 = vector.extract_strided_slice %24 {offsets = [0, 0], sizes = [8, 4], strides = [1, 1]} : vector<8x128xf32> to vector<8x4xf32>
    %28 = vector.broadcast %26 : vector<8x1xf32> to vector<8x4xf32>
    %29 = arith.divf %27, %28 : vector<8x4xf32>
    %c0_19 = arith.constant 0 : index
    %c0_20 = arith.constant 0 : index
    %30 = vector.load %arg8[%c0_19, %c0_20] : memref<8x4xf32, #tpu.memory_space<vmem>>, vector<8x4xf32>
    tpu.vector_store %arg8[%c0_19, %c0_20], %29 {strides = array<i32>} : memref<8x4xf32, #tpu.memory_space<vmem>>, vector<8x4xf32>,
    return
  }
  func.func @transform_0(%arg0: i32) -> (i32, i32) {
    %c0_i32 = arith.constant 0 : i32
    %c0_i32_0 = arith.constant 0 : i32
    return %arg0, %c0_i32 : i32, i32
  }
  func.func @transform_1(%arg0: i32) -> (i32, i32) {
    %c0_i32 = arith.constant 0 : i32
    %c0_i32_0 = arith.constant 0 : i32
    %c0_i32_1 = arith.constant 0 : i32
    return %c0_i32, %c0_i32_0 : i32, i32
  }
  func.func @transform_2(%arg0: i32) -> (i32, i32) {
    %c0_i32 = arith.constant 0 : i32
    %c0_i32_0 = arith.constant 0 : i32
    %c0_i32_1 = arith.constant 0 : i32
    return %c0_i32, %c0_i32_0 : i32, i32
  }
  func.func @transform_3(%arg0: i32) -> (i32, i32) {
    %c0_i32 = arith.constant 0 : i32
    %c0_i32_0 = arith.constant 0 : i32
    %c0_i32_1 = arith.constant 0 : i32
    return %c0_i32, %c0_i32_0 : i32, i32
  }
  func.func @transform_4(%arg0: i32) -> (i32, i32) {
    %c0_i32 = arith.constant 0 : i32
    %c0_i32_0 = arith.constant 0 : i32
    %c0_i32_1 = arith.constant 0 : i32
    return %c0_i32, %c0_i32_0 : i32, i32
  }
  func.func @transform_5(%arg0: i32) -> (i32, i32) {
    %c0_i32 = arith.constant 0 : i32
    %c0_i32_0 = arith.constant 0 : i32
    %c0_i32_1 = arith.constant 0 : i32
    return %c0_i32, %c0_i32_0 : i32, i32
  }
  func.func @transform_6(%arg0: i32) -> (i32, i32) {
    %c0_i32 = arith.constant 0 : i32
    %c0_i32_0 = arith.constant 0 : i32
    %c0_i32_1 = arith.constant 0 : i32
    return %c0_i32, %c0_i32_0 : i32, i32
  }
  func.func @transform_7(%arg0: i32) -> (i32, i32) {
    %c0_i32 = arith.constant 0 : i32
    %c0_i32_0 = arith.constant 0 : i32
    return %arg0, %c0_i32 : i32, i32
  }
}

</mosaic_0001>

<llo_original>
// kernel: _actor_forward_impl.1
$region0: #{_actor_forward_impl.1}
  #allocation0 [shape = 'u32[]', space=smem, size = 0x4, offset = 0x4, fixed_abs, tag = 'smem constant byte address 0x4 - core index']
  #allocation1 [shape = 'u32[72,128]{1,0:T(1,128)}', space=vmem, size = 0x9000, scoped, tag = 'internal scratch']
  %s0 = inlined_call_operand.vmem [shape: f32[8,8], index: 0, kind: input, shape index: {}]
  %s1 = inlined_call_operand.vmem [shape: f32[8,16], index: 1, kind: input, shape index: {}]
  %s2 = inlined_call_operand.vmem [shape: f32[1,16], index: 2, kind: input, shape index: {}]
  %s3 = inlined_call_operand.hbm [shape: f32[16,32], index: 3, kind: input, shape index: {}]
  %s4 = inlined_call_operand.vmem [shape: f32[1,32], index: 4, kind: input, shape index: {}]
  %s5 = inlined_call_operand.hbm [shape: f32[32,128], index: 5, kind: input, shape index: {}]
  %s6 = inlined_call_operand.vmem [shape: f32[1,128], index: 6, kind: input, shape index: {}]
  %s7 = inlined_call_operand.vmem [shape: f32[8,4], index: 7, kind: output, shape index: {}]
  %s8 = sld [smem:[#allocation0]]
  $region46: #{_actor_forward_impl.1} parent=0
    _
  %s10 = ssub.s32 1, %s8
  %s11 = scalar_select 0, %s10, %s8
  $region1: #{_actor_forward_impl.1} parent=0
    #allocation2 [shape = 'u8[8192]{0}', space=vmem, size = 0x2000, scoped, tag = 'input window, operand 3, single buffered']
    #allocation3 [shape = 's32[1]{0}', space=sflag, size = 0x4, scoped, tag = 'scoped memory for _actor_forward_impl.1']
    #allocation4 [shape = 'u8[16384]{0}', space=vmem, size = 0x4000, scoped, tag = 'input window, operand 5, single buffered']
    #allocation5 [shape = 's32[1]{0}', space=sflag, size = 0x4, scoped, tag = 'scoped memory for _actor_forward_impl.1']
    %12 = vsyncpa [#allocation3], 0
    %13 = vsyncpa [#allocation5], 0
    // Predicated region
    $region2: #{_actor_forward_impl.1} parent=1 // pred_check
      _
    $region3: #{_actor_forward_impl.1} parent=1 // pred_check_branch
      %15 = sbr.rel (0) target = $region5
    $region4: #{_actor_forward_impl.1} parent=1 // pred_region
      _
    $region5: #{_actor_forward_impl.1} parent=1 // pred_fallthru
      _
    // Predicated region
    $region6: #{_actor_forward_impl.1} parent=1 // pred_check
      _
    $region7: #{_actor_forward_impl.1} parent=1 // pred_check_branch
      %17 = sbr.rel (0) target = $region9
    $region8: #{_actor_forward_impl.1} parent=1 // pred_region
      _
    $region9: #{_actor_forward_impl.1} parent=1 // pred_fallthru
      _
    // Predicated region
    $region10: #{_actor_forward_impl.1} parent=1 // pred_check
      _
    $region11: #{_actor_forward_impl.1} parent=1 // pred_check_branch
      %19 = sbr.rel (0) target = $region13
    $region12: #{_actor_forward_impl.1} parent=1 // pred_region
      _
    $region13: #{_actor_forward_impl.1} parent=1 // pred_fallthru
      _
    // Predicated region
    $region14: #{_actor_forward_impl.1} parent=1 // pred_check
      _
    $region15: #{_actor_forward_impl.1} parent=1 // pred_check_branch
      %21 = sbr.rel (0) target = $region17
    $region16: #{_actor_forward_impl.1} parent=1 // pred_region
      %23 = vsyncadd [#allocation3], 0
      %s24 = sshll.u32 %s3, 4
      %s25 = int_to_ptr.hbm [resolvable:$true] %s24
      %s26 = sshll.u32 [#allocation2], 4
      %s27 = int_to_ptr.vmem [resolvable:$true] %s26
      %32 = dma.hbm_to_vmem [thread:$0]  %s25, 256, %s27, [#allocation3], 128, 128, 8
    $region17: #{_actor_forward_impl.1} parent=1 // pred_fallthru
      _
    // Predicated region
    $region18: #{_actor_forward_impl.1} parent=1 // pred_check
      _
    $region19: #{_actor_forward_impl.1} parent=1 // pred_check_branch
      %34 = sbr.rel (0) target = $region21
    $region20: #{_actor_forward_impl.1} parent=1 // pred_region
      _
    $region21: #{_actor_forward_impl.1} parent=1 // pred_fallthru
      _
    // Predicated region
    $region22: #{_actor_forward_impl.1} parent=1 // pred_check
      _
    $region23: #{_actor_forward_impl.1} parent=1 // pred_check_branch
      %36 = sbr.rel (0) target = $region25
    $region24: #{_actor_forward_impl.1} parent=1 // pred_region
      %38 = vsyncadd [#allocation5], 0
      %s39 = sshll.u32 %s5, 4
      %s40 = int_to_ptr.hbm [resolvable:$true] %s39
      %s41 = sshll.u32 [#allocation4], 4
      %s42 = int_to_ptr.vmem [resolvable:$true] %s41
      %47 = dma.hbm_to_vmem [thread:$0]  %s40, 512, %s42, [#allocation5], 128, 128, 8
    $region25: #{_actor_forward_impl.1} parent=1 // pred_fallthru
      _
    // Predicated region
    $region26: #{_actor_forward_impl.1} parent=1 // pred_check
      _
    $region27: #{_actor_forward_impl.1} parent=1 // pred_check_branch
      %49 = sbr.rel (0) target = $region29
    $region28: #{_actor_forward_impl.1} parent=1 // pred_region
      _
    $region29: #{_actor_forward_impl.1} parent=1 // pred_fallthru
      _
    // Predicated region
    $region30: #{_actor_forward_impl.1} parent=1 // pred_check
      _
    $region31: #{_actor_forward_impl.1} parent=1 // pred_check_branch
      %51 = sbr.rel (0) target = $region33
    $region32: #{_actor_forward_impl.1} parent=1 // pred_region
      %53 = dma.done [#allocation3], 256
    $region33: #{_actor_forward_impl.1} parent=1 // pred_fallthru
      _
    // Predicated region
    $region34: #{_actor_forward_impl.1} parent=1 // pred_check
      _
    $region35: #{_actor_forward_impl.1} parent=1 // pred_check_branch
      %55 = sbr.rel (0) target = $region37
    $region36: #{_actor_forward_impl.1} parent=1 // pred_region
      %57 = dma.done [#allocation5], 512
    $region37: #{_actor_forward_impl.1} parent=1 // pred_fallthru
      _
    %v58 = vld [vmem:[%s0] sm:$0xff]
    %v59 = vld [vmem:[%s1] sm:$0xff]
    %v60 = vld [vmem:[%s2] sm:$0x1]
    %v62 = vperm.slane %v60, 0
    %vm64 = vcmask 64512
    %v66 = vsel %vm64, %v58, 0
    %68 = vmatpush.msra.mxu0 0.0
    %69 = vmatpush.msra.mxu0 0.0
    %70 = vmatpush.msra.mxu0 0.0
    %71 = vmatpush.msra.mxu0 0.0
    %72 = vmatpush.msra.mxu0 0.0
    %73 = vmatpush.msra.mxu0 0.0
    %74 = vmatpush.msra.mxu0 0.0
    %75 = vmatpush.msra.mxu0 0.0
    %76 = vmatpush.msra.mxu0 0.0
    %77 = vmatpush.msra.mxu0 0.0
    %78 = vmatpush.msra.mxu0 0.0
    %79 = vmatpush.msra.mxu0 0.0
    %80 = vmatpush.msra.mxu0 0.0
    %81 = vmatpush.msra.mxu0 0.0
    %82 = vmatpush.msra.mxu0 0.0
    %83 = vmatpush.msra.mxu0 %v59
    %84 = vmatmul.f32.gmra.mxu0 %v66
    %v85 = vpop.f32.mrf.mxu0
    %v86 = vadd.f32 %v62, %v85
    %87 = vdwg.mxu0
    %v88 = vmax.f32 %v86, 0.0
    %v89 = vld [vmem:[#allocation2] sm:$0xff]
    %v90 = vld [vmem:[#allocation2 + $0x8] sm:$0xff]
    %v91 = vld [vmem:[%s4] sm:$0x1]
    %v93 = vperm.slane %v91, 0
    %vm95 = vcmask 130048
    %v97 = vsel %vm95, %v88, 0
    %99 = vmatpush.msra.mxu0 0.0
    %100 = vmatpush.msra.mxu0 0.0
    %101 = vmatpush.msra.mxu0 0.0
    %102 = vmatpush.msra.mxu0 0.0
    %103 = vmatpush.msra.mxu0 0.0
    %104 = vmatpush.msra.mxu0 0.0
    %105 = vmatpush.msra.mxu0 0.0
    %106 = vmatpush.msra.mxu0 0.0
    %107 = vmatpush.msra.mxu0 0.0
    %108 = vmatpush.msra.mxu0 0.0
    %109 = vmatpush.msra.mxu0 0.0
    %110 = vmatpush.msra.mxu0 0.0
    %111 = vmatpush.msra.mxu0 0.0
    %112 = vmatpush.msra.mxu0 0.0
    %113 = vmatpush.msra.mxu0 %v90
    %114 = vmatpush.msra.mxu0 %v89
    %115 = vmatmul.f32.gmra.mxu0 %v97
    %v116 = vpop.f32.mrf.mxu0
    %v117 = vadd.f32 %v93, %v116
    %118 = vdwg.mxu0
    %v119 = vmax.f32 %v117, 0.0
    %v120 = vld [vmem:[#allocation4] sm:$0xff]
    %v121 = vld [vmem:[#allocation4 + $0x8] sm:$0xff]
    %v122 = vld [vmem:[#allocation4 + $0x10] sm:$0xff]
    %v123 = vld [vmem:[#allocation4 + $0x18] sm:$0xff]
    %v124 = vld [vmem:[%s6] sm:$0x1]
    %v126 = vperm.slane %v124, 0
    %vm128 = vcmask 261120
    %v130 = vsel %vm128, %v119, 0
    %132 = vmatpush.msra.mxu0 0.0
    %133 = vmatpush.msra.mxu0 0.0
    %134 = vmatpush.msra.mxu0 0.0
    %135 = vmatpush.msra.mxu0 0.0
    %136 = vmatpush.msra.mxu0 0.0
    %137 = vmatpush.msra.mxu0 0.0
    %138 = vmatpush.msra.mxu0 0.0
    %139 = vmatpush.msra.mxu0 0.0
    %140 = vmatpush.msra.mxu0 0.0
    %141 = vmatpush.msra.mxu0 0.0
    %142 = vmatpush.msra.mxu0 0.0
    %143 = vmatpush.msra.mxu0 0.0
    %144 = vmatpush.msra.mxu0 %v123
    %145 = vmatpush.msra.mxu0 %v122
    %146 = vmatpush.msra.mxu0 %v121
    %147 = vmatpush.msra.mxu0 %v120
    %148 = vmatmul.f32.gmra.mxu0 %v130
    %v149 = vpop.f32.mrf.mxu0
    %v150 = vadd.f32 %v126, %v149
    %151 = vdwg.mxu0
    %152 = vmax.xlane.f32.xlu0 %v150
    %v153 = vpop.xlane.xlu0 %152
    %v154 = vsub.f32 %v150, %v153
    %v155 = vmul.f32 %v154, 1.442695
    %v156 = vpow.pop %v155
    %157 = vadd.xlane.f32.xlu0 %v156
    %v158 = vpop.xlane.xlu0 %157
    %v159 = vrcp.pop %v158
    %v160 = vmul.f32 %v158, %v159
    %v161 = vsub.f32 1.0, %v160
    %v162 = vmul.f32 %v159, %v161
    %v163 = vadd.f32 %v159, %v162
    %vm164 = vweird.f32 %v158
    %vm165 = vweird.f32 %v159
    %vm166 = vmor %vm164, %vm165
    %v167 = vsel %vm166, %v159, %v163
    %v168 = vand.u32 2147483647, %v158
    %vm169 = vcmp.eq.f32.partialorder %v168, 8.507059e+37
    %v170 = vand.u32 %v158, 2147483648
    %v171 = vor.u32 1.1754944e-38, %v170
    %v172 = vsel %vm169, %v171, %v167
    %v173 = vmul.f32 %v156, %v172
    %vm174 = vcmask 31744
    %175 = vst.msk [vmem:[%s7] sm:$0xff] %vm174, %v173
    // Predicated region
    $region38: #{_actor_forward_impl.1} parent=1 // pred_check
      _
    $region39: #{_actor_forward_impl.1} parent=1 // pred_check_branch
      %177 = sbr.rel (0) target = $region41
    $region40: #{_actor_forward_impl.1} parent=1 // pred_region
      _
    $region41: #{_actor_forward_impl.1} parent=1 // pred_fallthru
      _
    // Predicated region
    $region42: #{_actor_forward_impl.1} parent=1 // pred_check
      _
    $region43: #{_actor_forward_impl.1} parent=1 // pred_check_branch
      %179 = sbr.rel (0) target = $region45
    $region44: #{_actor_forward_impl.1} parent=1 // pred_region
      _
    $region45: #{_actor_forward_impl.1} parent=1 // pred_fallthru
      _
    %180 = vsyncpa [#allocation3], 1
    %181 = vsyncpa [#allocation5], 1

</llo_original>
